<compile_context>
chip_gen: v5e
topology: v5e:2x2
jax: 0.10.0
libtpu: 0.0.40
codegen_flags: <defaults>
</compile_context>

<pallas_src>
import functools

import jax
import jax.numpy as jnp
from jax.experimental import pallas as pl
from jax.experimental.pallas import tpu as pltpu


def _msloss_kernel(out_ref, tgt_ref, res_ref, *, H, W):
    # out_ref: (1, co_tile, HW)   -> output[b, cb*co_tile:(cb+1)*co_tile], spatially flat
    # tgt_ref: (1, Ct, HW)        -> target[b, :], spatially flat
    # res_ref: (1, 1, 2, co_tile) -> row 0: level-set partial sums, row 1: TV partial sums
    HW = H * W
    Ct = tgt_ref.shape[1]

    o = out_ref[0].astype(jnp.float32)      # (co_tile, HW)
    t = tgt_ref[0].astype(jnp.float32)      # (Ct, HW)

    # Contract the spatial (lane) axis of both operands -> (rows_lhs, co_tile).
    nt = (((1,), (1,)), ((), ()))

    # ---- level-set term (single MXU contraction over HW) ----------------------
    # sum_p (t - pc)^2 * o  ==  sum(t^2*o) - (sum(t*o))^2 / sum(o)
    lhs = jnp.concatenate(
        [jnp.ones((1, HW), jnp.float32), t, t * t], axis=0)           # (1+2Ct, HW)
    m = jax.lax.dot_general(lhs, o, nt,
                            preferred_element_type=jnp.float32)       # (1+2Ct, co_tile)
    s0 = m[0:1]                     # (1, co_tile)   sum(o)
    sto = m[1:1 + Ct]               # (Ct, co_tile)  sum(t*o)
    st2o = m[1 + Ct:1 + 2 * Ct]     # (Ct, co_tile)  sum(t^2*o)
    # NOTE: divides by sum(o) per channel (same precondition as the PyTorch ref:
    # output planes must not sum to zero). Exact divide kept for precision.
    ls = (jnp.sum(st2o, axis=0, keepdims=True)
          - jnp.sum(sto * sto, axis=0, keepdims=True) / s0)           # (1, co_tile)

    # ---- TV / gradient term (penalty == 'l1') ----------------------------------
    # Circular neighbors via XLU roll; wrap positions are excluded by folding the
    # validity mask into the reducing vector of the MXU dot (mask_row . |diff|).
    col = jax.lax.broadcasted_iota(jnp.int32, (1, HW), 1)
    mask_w = (col % W < W - 1).astype(jnp.float32)                    # valid dW cols
    mask_h = (col < (H - 1) * W).astype(jnp.float32)                  # valid dH rows
    o_next_w = pltpu.roll(o, HW - 1, axis=1)      # out[i] = o[i+1] (circular)
    o_next_h = pltpu.roll(o, HW - W, axis=1)      # out[i] = o[i+W] (circular)
    tv = (jax.lax.dot_general(mask_w, jnp.abs(o_next_w - o), nt,
                              preferred_element_type=jnp.float32)
          + jax.lax.dot_general(mask_h, jnp.abs(o_next_h - o), nt,
                                preferred_element_type=jnp.float32))  # (1, co_tile)

    res_ref[...] = jnp.concatenate([ls, tv], axis=0).reshape(res_ref.shape)


def msloss_pallas(output, target, beta=1e-07, lambdaTV=0.001, co_tile=None):
    B, Co, H, W = output.shape
    Bt, Ct, Ht, Wt = target.shape
    assert (B, H, W) == (Bt, Ht, Wt), "output/target batch+spatial mismatch"
    HW = H * W

    if co_tile is None:
        co_tile = Co
    assert Co % co_tile == 0, "co_tile must divide Co"
    assert co_tile == Co or co_tile % 8 == 0, "partial channel blocks must be sublane-aligned"
    n_cb = Co // co_tile

    # Flatten spatial dims outside the kernel (layout-only for contiguous NCHW).
    out_flat = output.reshape(B, Co, HW)
    tgt_flat = target.reshape(B, Ct, HW)

    kernel = functools.partial(_msloss_kernel, H=H, W=W)

    res = pl.pallas_call(
        kernel,
        out_shape=jax.ShapeDtypeStruct((B, n_cb, 2, co_tile), jnp.float32),
        grid=(B, n_cb),
        in_specs=[
            pl.BlockSpec((1, co_tile, HW), lambda b, cb: (b, cb, 0)),
            # Block index independent of cb -> target stays resident in VMEM
            # across the channel axis; b is the outermost grid axis.
            pl.BlockSpec((1, Ct, HW), lambda b, cb: (b, 0, 0)),
        ],
        out_specs=pl.BlockSpec((1, 1, 2, co_tile), lambda b, cb: (b, cb, 0, 0)),
        compiler_params=pltpu.CompilerParams(
            dimension_semantics=("parallel", "parallel")),
    )(out_flat, tgt_flat)

    loss_L = jnp.sum(res[:, :, 0, :]) / 4.0
    loss_A = (jnp.sum(res[:, :, 1, :]) / 4.0) * lambdaTV
    return (loss_L + loss_A) * beta


def msloss_ref(output, target, beta=1e-07, lambdaTV=0.001):
    """Pure-JAX mirror of the PyTorch forward, for verification."""
    output = output.astype(jnp.float32)
    target = target.astype(jnp.float32)
    B, Co, H, W = output.shape
    Ct = target.shape[1]

    loss = 0.0
    for ich in range(Ct):
        t = jnp.broadcast_to(target[:, ich:ich + 1], (B, Co, H, W))
        pcentroid = jnp.sum(t * output, axis=(2, 3)) / jnp.sum(output, axis=(2, 3))
        pcentroid = pcentroid.reshape(B, Co, 1, 1)
        plevel = t - pcentroid
        loss = loss + jnp.sum(plevel * plevel * output) / 4.0

    dH = jnp.abs(output[:, :, 1:, :] - output[:, :, :-1, :])
    dW = jnp.abs(output[:, :, :, 1:] - output[:, :, :, :-1])
    loss_A = (jnp.sum(dH) + jnp.sum(dW)) / 4.0

    return (loss + loss_A * lambdaTV) * beta


if __name__ == "__main__":
    key = jax.random.PRNGKey(0)
    k1, k2 = jax.random.split(key)

    B, Co, Ct, H, W = 2, 4, 3, 16, 16
    # Positive "probability-like" output keeps the centroid denominator well-behaved.
    output = jax.random.uniform(k1, (B, Co, H, W), dtype=jnp.float32) + 0.1
    target = jax.random.uniform(k2, (B, Ct, H, W), dtype=jnp.float32)

    loss = jax.block_until_ready(msloss_pallas(output, target))
    ref = jax.block_until_ready(msloss_ref(output, target))

    assert jnp.isfinite(loss), "non-finite loss"
    assert jnp.allclose(loss, ref, rtol=1e-3, atol=1e-9), (loss, ref)

    print("KERNEL_OK")
</pallas_src>

<mosaic_0001>
module attributes {stable_mosaic.version = 11 : i64} {
  func.func @_msloss_kernel(%arg0: i32, %arg1: i32, %arg2: memref<1x4x256xf32, #tpu.memory_space<vmem>>, %arg3: memref<1x3x256xf32, #tpu.memory_space<vmem>>, %arg4: memref<1x1x2x4xf32, #tpu.memory_space<vmem>>) attributes {dimension_semantics = [#tpu.dimension_semantics<parallel>, #tpu.dimension_semantics<parallel>], iteration_bounds = array<i64: 2, 1>, scalar_prefetch = 0 : i64, scratch_operands = 0 : i64, tpu.core_type = #tpu.core_type<tc>, window_params = [{transform_indices = @transform_0, window_bounds = array<i64: 1, 4, 256>}, {transform_indices = @transform_1, window_bounds = array<i64: 1, 3, 256>}, {transform_indices = @transform_2, window_bounds = array<i64: 1, 1, 2, 4>}]} {
    %c0 = arith.constant 0 : index
    %c0_0 = arith.constant 0 : index
    %c0_1 = arith.constant 0 : index
    %0 = vector.load %arg2[%c0, %c0_0, %c0_1] : memref<1x4x256xf32, #tpu.memory_space<vmem>>, vector<1x4x256xf32>
    %1 = vector.shape_cast %0 : vector<1x4x256xf32> to vector<4x256xf32>
    %c0_2 = arith.constant 0 : index
    %c0_3 = arith.constant 0 : index
    %c0_4 = arith.constant 0 : index
    %2 = vector.load %arg3[%c0_2, %c0_3, %c0_4] : memref<1x3x256xf32, #tpu.memory_space<vmem>>, vector<1x3x256xf32>
    %3 = vector.shape_cast %2 : vector<1x3x256xf32> to vector<3x256xf32>
    %cst = arith.constant 1.000000e+00 : f32
    %4 = vector.broadcast %cst : f32 to vector<1x256xf32>
    %5 = arith.mulf %3, %3 : vector<3x256xf32>
    %6 = tpu.concatenate %4, %3, %5 in 0 : vector<1x256xf32>, vector<3x256xf32>, vector<3x256xf32> -> vector<7x256xf32>
    %cst_5 = arith.constant dense<0.000000e+00> : vector<7x4xf32>
    %7 = tpu.matmul %6, %1, %cst_5 {dimension_numbers = #tpu.dot_dimension_numbers<[1], [1], [0], [0], [0, 0, 1, 0], [], []>} : vector<7x256xf32>, vector<4x256xf32>, vector<7x4xf32> -> vector<7x4xf32>
    %8 = vector.extract_strided_slice %7 {offsets = [0, 0], sizes = [1, 4], strides = [1, 1]} : vector<7x4xf32> to vector<1x4xf32>
    %9 = vector.extract_strided_slice %7 {offsets = [1, 0], sizes = [3, 4], strides = [1, 1]} : vector<7x4xf32> to vector<3x4xf32>
    %10 = vector.extract_strided_slice %7 {offsets = [4, 0], sizes = [3, 4], strides = [1, 1]} : vector<7x4xf32> to vector<3x4xf32>
    %cst_6 = arith.constant dense<0.000000e+00> : vector<4xf32>
    %11 = vector.multi_reduction <add>, %10, %cst_6 [0] : vector<3x4xf32> to vector<4xf32>
    %12 = vector.shape_cast %11 : vector<4xf32> to vector<1x4xf32>
    %13 = arith.mulf %9, %9 : vector<3x4xf32>
    %cst_7 = arith.constant dense<0.000000e+00> : vector<4xf32>
    %14 = vector.multi_reduction <add>, %13, %cst_7 [0] : vector<3x4xf32> to vector<4xf32>
    %15 = vector.shape_cast %14 : vector<4xf32> to vector<1x4xf32>
    %16 = arith.divf %15, %8 : vector<1x4xf32>
    %17 = arith.subf %12, %16 : vector<1x4xf32>
    %18 = tpu.iota {dimensions = array<i32: 1>} : vector<1x256xi32>
    %c16_i32 = arith.constant 16 : i32
    %c0_i32 = arith.constant 0 : i32
    %19 = arith.cmpi eq, %c16_i32, %c0_i32 : i32
    %c1_i32 = arith.constant 1 : i32
    %20 = arith.select %19, %c1_i32, %c16_i32 : i32
    %21 = vector.broadcast %20 : i32 to vector<1x256xi32>
    %22 = arith.remsi %18, %21 : vector<1x256xi32>
    %c0_i32_8 = arith.constant 0 : i32
    %23 = vector.broadcast %c0_i32_8 : i32 to vector<1x256xi32>
    %24 = arith.cmpi ne, %22, %23 : vector<1x256xi32>
    %c0_i32_9 = arith.constant 0 : i32
    %25 = vector.broadcast %c0_i32_9 : i32 to vector<1x256xi32>
    %26 = arith.cmpi slt, %22, %25 : vector<1x256xi32>
    %c0_i32_10 = arith.constant 0 : i32
    %27 = arith.cmpi slt, %20, %c0_i32_10 : i32
    %28 = vector.broadcast %27 : i1 to vector<1x256xi1>
    %29 = vector.broadcast %28 : vector<1x256xi1> to vector<1x256xi1>
    %30 = arith.xori %26, %29 : vector<1x256xi1>
    %31 = arith.andi %30, %24 : vector<1x256xi1>
    %32 = vector.broadcast %20 : i32 to vector<1x256xi32>
    %33 = arith.addi %22, %32 : vector<1x256xi32>
    %34 = arith.select %31, %33, %22 : vector<1x256xi1>, vector<1x256xi32>
    %c15_i32 = arith.constant 15 : i32
    %35 = vector.broadcast %c15_i32 : i32 to vector<1x256xi32>
    %36 = arith.cmpi slt, %34, %35 : vector<1x256xi32>
    %37 = arith.extui %36 : vector<1x256xi1> to vector<1x256xi32>
    %38 = arith.sitofp %37 : vector<1x256xi32> to vector<1x256xf32>
    %c240_i32 = arith.constant 240 : i32
    %39 = vector.broadcast %c240_i32 : i32 to vector<1x256xi32>
    %40 = arith.cmpi slt, %18, %39 : vector<1x256xi32>
    %41 = arith.extui %40 : vector<1x256xi1> to vector<1x256xi32>
    %42 = arith.sitofp %41 : vector<1x256xi32> to vector<1x256xf32>
    %c255_i32 = arith.constant 255 : i32
    %43 = tpu.dynamic_rotate %1 by %c255_i32 dim 1 : vector<4x256xf32>, i32 -> vector<4x256xf32>
    %c240_i32_11 = arith.constant 240 : i32
    %44 = tpu.dynamic_rotate %1 by %c240_i32_11 dim 1 : vector<4x256xf32>, i32 -> vector<4x256xf32>
    %45 = arith.subf %43, %1 : vector<4x256xf32>
    %46 = math.absf %45 : vector<4x256xf32>
    %cst_12 = arith.constant dense<0.000000e+00> : vector<1x4xf32>
    %47 = tpu.matmul %38, %46, %cst_12 {dimension_numbers = #tpu.dot_dimension_numbers<[1], [1], [0], [0], [0, 0, 1, 0], [], []>} : vector<1x256xf32>, vector<4x256xf32>, vector<1x4xf32> -> vector<1x4xf32>
    %48 = arith.subf %44, %1 : vector<4x256xf32>
    %49 = math.absf %48 : vector<4x256xf32>
    %cst_13 = arith.constant dense<0.000000e+00> : vector<1x4xf32>
    %50 = tpu.matmul %42, %49, %cst_13 {dimension_numbers = #tpu.dot_dimension_numbers<[1], [1], [0], [0], [0, 0, 1, 0], [], []>} : vector<1x256xf32>, vector<4x256xf32>, vector<1x4xf32> -> vector<1x4xf32>
    %51 = arith.addf %47, %50 : vector<1x4xf32>
    %52 = tpu.concatenate %17, %51 in 0 : vector<1x4xf32>, vector<1x4xf32> -> vector<2x4xf32>
    %53 = vector.shape_cast %52 : vector<2x4xf32> to vector<1x1x2x4xf32>
    %c0_14 = arith.constant 0 : index
    %c0_15 = arith.constant 0 : index
    %c0_16 = arith.constant 0 : index
    %c0_17 = arith.constant 0 : index
    %54 = vector.load %arg4[%c0_14, %c0_15, %c0_16, %c0_17] : memref<1x1x2x4xf32, #tpu.memory_space<vmem>>, vector<1x1x2x4xf32>
    tpu.vector_store %arg4[%c0_14, %c0_15, %c0_16, %c0_17], %53 {strides = array<i32>} : memref<1x1x2x4xf32, #tpu.memory_space<vmem>>, vector<1x1x2x4xf32>,
    return
  }
  func.func @transform_0(%arg0: i32, %arg1: i32) -> (i32, i32, i32) {
    %c0_i32 = arith.constant 0 : i32
    %c0_i32_0 = arith.constant 0 : i32
    return %arg0, %arg1, %c0_i32 : i32, i32, i32
  }
  func.func @transform_1(%arg0: i32, %arg1: i32) -> (i32, i32, i32) {
    %c0_i32 = arith.constant 0 : i32
    %c0_i32_0 = arith.constant 0 : i32
    %c0_i32_1 = arith.constant 0 : i32
    return %arg0, %c0_i32, %c0_i32_0 : i32, i32, i32
  }
  func.func @transform_2(%arg0: i32, %arg1: i32) -> (i32, i32, i32, i32) {
    %c0_i32 = arith.constant 0 : i32
    %c0_i32_0 = arith.constant 0 : i32
    %c0_i32_1 = arith.constant 0 : i32
    return %arg0, %arg1, %c0_i32, %c0_i32_0 : i32, i32, i32, i32
  }
}

</mosaic_0001>

<llo_original>
// kernel: tpu_custom_call.1
$region0: #{tpu_custom_call.1}
  #allocation0 [shape = 'u32[]', space=smem, size = 0x4, offset = 0x4, fixed_abs, tag = 'smem constant byte address 0x4 - core index']
  #allocation1 [shape = 'u32[72,128]{1,0:T(1,128)}', space=vmem, size = 0x9000, scoped, tag = 'internal scratch']
  %s0 = inlined_call_operand.vmem [shape: f32[2,4,256], index: 0, kind: input, shape index: {}]
  %s1 = inlined_call_operand.vmem [shape: f32[2,3,256], index: 1, kind: input, shape index: {}]
  %s2 = inlined_call_operand.hbm [shape: f32[2,1,2,4], index: 2, kind: output, shape index: {}]
  %s3 = sld [smem:[#allocation0]]
  $region41: #{tpu_custom_call.1} parent=0
    _
  %s5 = ssub.s32 1, %s3
  %s6 = scalar_select 0, %s5, %s3
  $region1: #{tpu_custom_call.1} parent=0
    #allocation2 [shape = 'u8[2048]{0}', space=vmem, size = 0x800, scoped, tag = 'output window, operand 0']
    #allocation3 [shape = 's32[2]{0}', space=sflag, size = 0x8, scoped, tag = 'scoped memory for tpu_custom_call.1']
    %7 = vsyncpa [#allocation3], 0
    %s8 = scalar_lea.sflag [#allocation3], 1
    %9 = vsyncpa %s8, 0
    loop: start=0, step=1, limit=4
    $region2: #{tpu_custom_call.1} parent=1 // loop_pre_header
      _
    $region3: #{tpu_custom_call.1} parent=1 // loop_header
      %s11 = sphi 0, %s15
      %p12 = scmp.ge.s32.totalorder %s11, 4
      %s18 = sphi 0, %s30
      %s19 = sphi 0, %s26
      %s20 = sphi 0, %s18
      %s21 = sphi 0, %s19
      %s22 = sphi 0, %s20
      %s23 = sphi 0, %s21
      %s35 = sphi 0, %s37
      %s38 = sphi 0, %s35
      %s39 = sphi 0, %s38
      %s55 = sphi 0, %s39
      %s61 = sphi 0, %s63
      %s64 = sphi 0, %s61
      %s65 = sphi 0, %s64
      %s81 = sphi 0, %s65
      %s89 = sphi 0, %s91
      %s92 = sphi 0, %s89
      %s93 = sphi 0, %s92
      %s109 = sphi 0, %s93
    $region4: #{tpu_custom_call.1} parent=1 // loop_header_branch
      %14 = sbr.rel (%p12) target = $region8
    $region5: #{tpu_custom_call.1} parent=1 // loop_body
      %s16 = ssub.s32 %s11, 1
      %s17 = ssub.s32 %s11, 2
      %s24 = sadd.s32 1, %s19
      %p25 = scmp.ge.s32.totalorder %s24, 1
      %s26 = scalar_select %p25, 0, %s24
      %s27 = sadd.s32 1, %s18
      %s28 = scalar_select %p25, %s27, %s18
      %p29 = scmp.ge.s32.totalorder %s28, 2
      %s30 = scalar_select %p29, 0, %s28
      %s31 = ssub.s32 %s18, %s30
      %s32 = ssub.s32 %s19, %s26
      %s33 = sor.u32 %s31, %s32
      %p34 = scmp.eq.s32.totalorder %s33, 0
      %s36 = sadd.s32 %s35, 1
      %s37 = scalar_select %p34, %s35, %s36
      %p40 = pneg %p34
      %p41 = scmp.eq.s32.totalorder %s11, 1
      %p42 = por %p40, %p41
      %p43 = scmp.ne.s32.totalorder %s35, %s38
      %p44 = scmp.eq.s32.totalorder %s11, 0
      %p45 = por %p43, %p44
      %p46 = scmp.ne.s32.totalorder %s35, %s38
      %p47 = scmp.eq.s32.totalorder %s16, 1
      %p48 = por %p46, %p47
      %p49 = scmp.ne.s32.totalorder %s38, %s39
      %p50 = scmp.eq.s32.totalorder %s16, 0
      %p51 = por %p49, %p50
      %p52 = scmp.ne.s32.totalorder %s38, %s39
      %p53 = scmp.eq.s32.totalorder %s17, 1
      %p54 = por %p52, %p53
      %p56 = scmp.ne.s32.totalorder %s39, %s55
      %p57 = scmp.eq.s32.totalorder %s17, 0
      %p58 = por %p56, %p57
      %s59 = ssub.s32 %s18, %s30
      %p60 = scmp.eq.s32.totalorder %s59, 0
      %s62 = sadd.s32 %s61, 1
      %s63 = scalar_select %p60, %s61, %s62
      %p66 = pneg %p60
      %p67 = scmp.eq.s32.totalorder %s11, 1
      %p68 = por %p66, %p67
      %p69 = scmp.ne.s32.totalorder %s61, %s64
      %p70 = scmp.eq.s32.totalorder %s11, 0
      %p71 = por %p69, %p70
      %p72 = scmp.ne.s32.totalorder %s61, %s64
      %p73 = scmp.eq.s32.totalorder %s16, 1
      %p74 = por %p72, %p73
      %p75 = scmp.ne.s32.totalorder %s64, %s65
      %p76 = scmp.eq.s32.totalorder %s16, 0
      %p77 = por %p75, %p76
      %p78 = scmp.ne.s32.totalorder %s64, %s65
      %p79 = scmp.eq.s32.totalorder %s17, 1
      %p80 = por %p78, %p79
      %p82 = scmp.ne.s32.totalorder %s65, %s81
      %p83 = scmp.eq.s32.totalorder %s17, 0
      %p84 = por %p82, %p83
      %s85 = ssub.s32 %s18, %s30
      %s86 = ssub.s32 %s19, %s26
      %s87 = sor.u32 %s85, %s86
      %p88 = scmp.eq.s32.totalorder %s87, 0
      %s90 = sadd.s32 %s89, 1
      %s91 = scalar_select %p88, %s89, %s90
      %p94 = pneg %p88
      %p95 = scmp.eq.s32.totalorder %s11, 1
      %p96 = por %p94, %p95
      %p97 = scmp.ne.s32.totalorder %s89, %s92
      %p98 = scmp.eq.s32.totalorder %s11, 0
      %p99 = por %p97, %p98
      %p100 = scmp.ne.s32.totalorder %s89, %s92
      %p101 = scmp.eq.s32.totalorder %s16, 1
      %p102 = por %p100, %p101
      %p103 = scmp.ne.s32.totalorder %s92, %s93
      %p104 = scmp.eq.s32.totalorder %s16, 0
      %p105 = por %p103, %p104
      %p106 = scmp.ne.s32.totalorder %s92, %s93
      %p107 = scmp.eq.s32.totalorder %s17, 1
      %p108 = por %p106, %p107
      %p110 = scmp.ne.s32.totalorder %s93, %s109
      %p111 = scmp.eq.s32.totalorder %s17, 0
      %p112 = por %p110, %p111
      %p113 = scmp.le.s32.totalorder 1, %s11
      %p114 = scmp.lt.s32.totalorder %s11, 3
      %p115 = pnand %p113, %p114
      %p116 = pneg %p115
      // Predicated region
      $region9: #{tpu_custom_call.1} parent=5 // pred_check
        _
      $region10: #{tpu_custom_call.1} parent=5 // pred_check_branch
        %118 = sbr.rel (%p115) target = $region12
      $region11: #{tpu_custom_call.1} parent=5 // pred_region
        %s119 = ssub.s32 %s11, 1
      $region12: #{tpu_custom_call.1} parent=5 // pred_fallthru
        _
      %p120 = scmp.lt.s32.totalorder %s11, 2
      // Predicated region
      $region13: #{tpu_custom_call.1} parent=5 // pred_check
        %p121 = pneg %p120
      $region14: #{tpu_custom_call.1} parent=5 // pred_check_branch
        %123 = sbr.rel (%p121) target = $region16
      $region15: #{tpu_custom_call.1} parent=5 // pred_region
        // Predicated region
        $region17: #{tpu_custom_call.1} parent=15 // pred_check
          %p124 = pneg %p45
        $region18: #{tpu_custom_call.1} parent=15 // pred_check_branch
          %126 = sbr.rel (%p124) target = $region20
        $region19: #{tpu_custom_call.1} parent=15 // pred_region
          %p127 = scmp.lt.s32.totalorder %s18, 1
          %s128 = scalar_select %p127, %s18, 1
          %p129 = scmp.lt.s32.totalorder %s19, 0
          %s130 = scalar_select %p129, %s19, 0
          %s131 = smul.addr %s130, 2
          %s132 = smul.addr %s128, 2
          %s133 = sadd.s32 %s131, %s132
          %s134 = smul.addr %s133, 4
          %s135 = scalar_lea.vmem %s0, %s134
        $region20: #{tpu_custom_call.1} parent=15 // pred_fallthru
          _
        // Predicated region
        $region21: #{tpu_custom_call.1} parent=15 // pred_check
          %p136 = pneg %p71
        $region22: #{tpu_custom_call.1} parent=15 // pred_check_branch
          %138 = sbr.rel (%p136) target = $region24
        $region23: #{tpu_custom_call.1} parent=15 // pred_region
          %p139 = scmp.lt.s32.totalorder %s18, 1
          %s140 = scalar_select %p139, %s18, 1
          %s141 = smul.addr %s140, 2
          %s142 = smul.addr %s141, 4
          %s143 = scalar_lea.vmem %s1, %s142
        $region24: #{tpu_custom_call.1} parent=15 // pred_fallthru
          _
      $region16: #{tpu_custom_call.1} parent=5 // pred_fallthru
        _
      %p144 = scmp.le.s32.totalorder 1, %s11
      %p145 = scmp.lt.s32.totalorder %s11, 3
      %p146 = pnand %p144, %p145
      %p147 = pneg %p146
      // Predicated region
      $region25: #{tpu_custom_call.1} parent=5 // pred_check
        _
      $region26: #{tpu_custom_call.1} parent=5 // pred_check_branch
        %149 = sbr.rel (%p146) target = $region28
      $region27: #{tpu_custom_call.1} parent=5 // pred_region
        %s150 = ssub.s32 %s11, 1
        %p151 = scmp.lt.s32.totalorder %s20, 1
        %s152 = scalar_select %p151, %s20, 1
        %p153 = scmp.lt.s32.totalorder %s21, 0
        %s154 = scalar_select %p153, %s21, 0
        %s155 = smul.addr %s154, 2
        %s156 = smul.addr %s152, 2
        %s157 = sadd.s32 %s155, %s156
        %s158 = smul.addr %s157, 4
        %s159 = scalar_lea.vmem %s0, %s158
        %p160 = pneg %p51
        %p161 = pneg %p48
        %p162 = scmp.lt.s32.totalorder %s20, 1
        %s163 = scalar_select %p162, %s20, 1
        %s164 = smul.addr %s163, 2
        %s165 = smul.addr %s164, 4
        %s166 = scalar_lea.vmem %s1, %s165
        %p167 = pneg %p77
        %p168 = pneg %p74
        %p169 = pneg %p105
        %p170 = pneg %p102
        %s171 = sand.u32 %s92, 1
        %s172 = scalar_lea.sflag [#allocation3], %s171
        %s173 = sand.u32 %s92, 1
        %s174 = smul.addr %s173, 2
        %s175 = scalar_lea.vmem [#allocation2], %s174
        %p176 = scmp.lt.s32.totalorder %s20, 1
        %s177 = scalar_select %p176, %s20, 1
        %p178 = scmp.lt.s32.totalorder %s21, 0
        %s179 = scalar_select %p178, %s21, 0
        %s180 = smul.addr %s179, 2
        %s181 = smul.addr %s177, 2
        %s182 = sadd.s32 %s180, %s181
        %s183 = smul.addr %s182, 4
        %s184 = scalar_lea.vmem %s0, %s183
        %p185 = scmp.lt.s32.totalorder %s20, 1
        %s186 = scalar_select %p185, %s20, 1
        %s187 = smul.addr %s186, 2
        %s188 = smul.addr %s187, 4
        %s189 = scalar_lea.vmem %s1, %s188
        %v190 = vld [vmem:[%s184] sm:$0xff]
        %v191 = vld [vmem:[%s189] sm:$0x77]
        %v192 = vmul.f32 %v191, %v191
        %194 = vst [vmem:[#allocation1] ss:$2 sm:$0xff] %v191
        %v195 = vld.sshfl [vmem:[#allocation1] sm:$0xff pattern:$0x75316420]
        %v196 = vld.sshfl [vmem:[#allocation1 + $0x8] sm:$0xff pattern:$0x75316420]
        %v197 = vrot.slane %v195, 7
        %v198 = vrot.slane %v196, 7
        %s202 = scalar_lea.vmem [#allocation1], 1
        %203 = vst [vmem:[%s202] ss:$2 sm:$0xff] %v192
        %v204 = vld.sshfl [vmem:[#allocation1] sm:$0xff pattern:$0x75316420]
        %v205 = vld.sshfl [vmem:[#allocation1 + $0x8] sm:$0xff pattern:$0x75316420]
        %vm208 = vcmask 1040384
        %v209 = vsel %vm208, 1.0, %v197
        %v210 = vsel %vm208, 1.0, %v198
        %vm211 = vcmask 1043456
        %v212 = vsel %vm211, %v209, %v204
        %v213 = vsel %vm211, %v210, %v205
        %215 = vst [vmem:[#allocation1] ss:$2 sm:$0xff] %v190
        %v216 = vld.sshfl [vmem:[#allocation1] sm:$0xff pattern:$0x75316420]
        %v217 = vld.sshfl [vmem:[#allocation1 + $0x8] sm:$0xff pattern:$0x75316420]
        %220 = vmatpush.xpose.msra.mxu0 0.0
        %221 = vmatpush.xpose.msra.mxu0 0.0
        %222 = vmatpush.xpose.msra.mxu0 0.0
        %223 = vmatpush.xpose.msra.mxu0 0.0
        %224 = vmatpush.xpose.msra.mxu0 0.0
        %225 = vmatpush.xpose.msra.mxu0 0.0
        %226 = vmatpush.xpose.msra.mxu0 0.0
        %227 = vmatpush.xpose.msra.mxu0 0.0
        %228 = vmatpush.xpose.msra.mxu0 0.0
        %229 = vmatpush.xpose.msra.mxu0 0.0
        %230 = vmatpush.xpose.msra.mxu0 0.0
        %231 = vmatpush.xpose.msra.mxu0 0.0
        %232 = vmatpush.xpose.msra.mxu0 0.0
        %233 = vmatpush.xpose.msra.mxu0 0.0
        %234 = vmatpush.xpose.msra.mxu0 0.0
        %235 = vmatpush.xpose.msra.mxu0 %v216
        %236 = vmatmul.f32.gmra.mxu0 %v212
        %v237 = vpop.f32.mrf.mxu0
        %v238 = vadd.f32 0.0, %v237
        %239 = vdwg.mxu0
        %240 = vmatpush.xpose.msra.mxu0 0.0
        %241 = vmatpush.xpose.msra.mxu0 0.0
        %242 = vmatpush.xpose.msra.mxu0 0.0
        %243 = vmatpush.xpose.msra.mxu0 0.0
        %244 = vmatpush.xpose.msra.mxu0 0.0
        %245 = vmatpush.xpose.msra.mxu0 0.0
        %246 = vmatpush.xpose.msra.mxu0 0.0
        %247 = vmatpush.xpose.msra.mxu0 0.0
        %248 = vmatpush.xpose.msra.mxu0 0.0
        %249 = vmatpush.xpose.msra.mxu0 0.0
        %250 = vmatpush.xpose.msra.mxu0 0.0
        %251 = vmatpush.xpose.msra.mxu0 0.0
        %252 = vmatpush.xpose.msra.mxu0 0.0
        %253 = vmatpush.xpose.msra.mxu0 0.0
        %254 = vmatpush.xpose.msra.mxu0 0.0
        %255 = vmatpush.xpose.msra.mxu0 %v217
        %256 = vmatmul.f32.gmra.mxu0 %v213
        %v257 = vpop.f32.mrf.mxu0
        %v258 = vadd.f32 %v238, %v257
        %259 = vdwg.mxu0
        %v261 = vrot.slane %v258, 4
        %vm263 = vcmask 26624
        %v264 = vsel %vm263, %v261, 0.0
        %v265 = vrot.slane %v264, 4
        %v266 = vadd.f32 %v264, %v265
        %v267 = vrot.slane %v266, 2
        %v268 = vadd.f32 %v266, %v267
        %v269 = vrot.slane %v268, 1
        %v270 = vadd.f32 %v268, %v269
        %v271 = vmul.f32 %v258, %v258
        %v273 = vrot.slane %v271, 1
        %v275 = vsel %vm263, %v273, 0.0
        %v276 = vrot.slane %v275, 4
        %v277 = vadd.f32 %v275, %v276
        %v278 = vrot.slane %v277, 2
        %v279 = vadd.f32 %v277, %v278
        %v280 = vrot.slane %v279, 1
        %v281 = vadd.f32 %v279, %v280
        %v282 = vrcp.pop %v258
        %v283 = vmul.f32 %v258, %v282
        %v284 = vsub.f32 1.0, %v283
        %v285 = vmul.f32 %v282, %v284
        %v286 = vadd.f32 %v282, %v285
        %vm287 = vweird.f32 %v258
        %vm288 = vweird.f32 %v282
        %vm289 = vmor %vm287, %vm288
        %v290 = vsel %vm289, %v282, %v286
        %v291 = vand.u32 2147483647, %v258
        %vm292 = vcmp.eq.f32.partialorder %v291, 8.507059e+37
        %v293 = vand.u32 %v258, 2147483648
        %v294 = vor.u32 1.1754944e-38, %v293
        %v295 = vsel %vm292, %v294, %v290
        %v296 = vmul.f32 %v281, %v295
        %v297 = vsub.f32 %v270, %v296
        %v298 = vlaneseq
        %v299 = vand.u32 %v298, 127
        %v300 = vadd.s32 %v299, 128
        %vm301 = vcmp.lt.s32.totalorder %v299, 0
        %v302 = vsub.s32 0, %v299
        %v303 = vsel %vm301, %v302, %v299
        %v304 = vshrl.u32 %v303, 4
        %v305 = vand.u32 %v303, 15
        %v306 = vsub.s32 0, %v305
        %v307 = vsel %vm301, %v306, %v305
        %vm308 = vcmp.lt.s32.totalorder %v300, 0
        %v309 = vsub.s32 0, %v300
        %v310 = vsel %vm308, %v309, %v300
        %v311 = vshrl.u32 %v310, 4
        %v312 = vand.u32 %v310, 15
        %v313 = vsub.s32 0, %v312
        %v314 = vsel %vm308, %v313, %v312
        %vm315 = vcmp.ne.s32.totalorder %v307, 0
        %vm316 = vcmp.ne.s32.totalorder %v314, 0
        %vm317 = vcmp.lt.s32.totalorder %v307, 0
        %vm318 = vcmp.lt.s32.totalorder %v314, 0
        %vm319 = vmand %vm317, %vm315
        %vm320 = vmand %vm318, %vm316
        %v321 = vadd.s32 %v307, 16
        %v322 = vadd.s32 %v314, 16
        %v323 = vsel %vm319, %v321, %v307
        %v324 = vsel %vm320, %v322, %v314
        %vm325 = vcmp.lt.s32.totalorder %v323, 15
        %vm326 = vcmp.lt.s32.totalorder %v324, 15
        %v327 = vsel %vm325, 1, 0
        %v328 = vsel %vm326, 1, 0
        %v329 = vcvt.s32.f32 %v327
        %v330 = vcvt.s32.f32 %v328
        %vm331 = vcmp.lt.s32.totalorder %v299, 240
        %vm332 = vcmp.lt.s32.totalorder %v300, 240
        %v333 = vsel %vm331, 1, 0
        %v334 = vsel %vm332, 1, 0
        %v335 = vcvt.s32.f32 %v333
        %v336 = vcvt.s32.f32 %v334
        %337 = vst [vmem:[#allocation1] ss:$2 sm:$0xff] %v190
        %v338 = vld.sshfl [vmem:[#allocation1] sm:$0xff pattern:$0x75316420]
        %v339 = vld.sshfl [vmem:[#allocation1 + $0x8] sm:$0xff pattern:$0x75316420]
        %342 = vrot.lane.b32.xlu0 %v338, 127
        %v343 = vpop.permute.xlu0 %342
        %344 = vrot.lane.b32.xlu0 %v339, 127
        %v345 = vpop.permute.xlu0 %344
        %vm346 = vcmp.lt.s32.totalorder %v299, 127
        %v347 = vsel %vm346, %v343, %v345
        %v348 = vsel %vm346, %v345, %v343
        %349 = vst [vmem:[#allocation1] ss:$2 sm:$0xff] %v190
        %v350 = vld.sshfl [vmem:[#allocation1] sm:$0xff pattern:$0x75316420]
        %v351 = vld.sshfl [vmem:[#allocation1 + $0x8] sm:$0xff pattern:$0x75316420]
        %354 = vrot.lane.b32.xlu0 %v350, 112
        %v355 = vpop.permute.xlu0 %354
        %356 = vrot.lane.b32.xlu0 %v351, 112
        %v357 = vpop.permute.xlu0 %356
        %vm358 = vcmp.lt.s32.totalorder %v299, 112
        %v359 = vsel %vm358, %v355, %v357
        %v360 = vsel %vm358, %v357, %v355
        %361 = vst [vmem:[#allocation1] ss:$2 sm:$0xff] %v190
        %v362 = vld.sshfl [vmem:[#allocation1] sm:$0xff pattern:$0x75316420]
        %v363 = vld.sshfl [vmem:[#allocation1 + $0x8] sm:$0xff pattern:$0x75316420]
        %v366 = vsub.f32 %v347, %v362
        %v367 = vsub.f32 %v348, %v363
        %v368 = vand.u32 2147483647, %v366
        %v369 = vand.u32 2147483647, %v367
        %370 = vst [vmem:[#allocation1] ss:$2 sm:$0xff] %v190
        %v371 = vld.sshfl [vmem:[#allocation1] sm:$0xff pattern:$0x75316420]
        %v372 = vld.sshfl [vmem:[#allocation1 + $0x8] sm:$0xff pattern:$0x75316420]
        %v375 = vsub.f32 %v359, %v371
        %v376 = vsub.f32 %v360, %v372
        %v377 = vand.u32 2147483647, %v375
        %v378 = vand.u32 2147483647, %v376
        %379 = vmatpush.xpose.msra.mxu0 0.0
        %380 = vmatpush.xpose.msra.mxu0 0.0
        %381 = vmatpush.xpose.msra.mxu0 0.0
        %382 = vmatpush.xpose.msra.mxu0 0.0
        %383 = vmatpush.xpose.msra.mxu0 0.0
        %384 = vmatpush.xpose.msra.mxu0 0.0
        %385 = vmatpush.xpose.msra.mxu0 0.0
        %386 = vmatpush.xpose.msra.mxu0 0.0
        %387 = vmatpush.xpose.msra.mxu0 0.0
        %388 = vmatpush.xpose.msra.mxu0 0.0
        %389 = vmatpush.xpose.msra.mxu0 0.0
        %390 = vmatpush.xpose.msra.mxu0 0.0
        %391 = vmatpush.xpose.msra.mxu0 0.0
        %392 = vmatpush.xpose.msra.mxu0 0.0
        %393 = vmatpush.xpose.msra.mxu0 0.0
        %394 = vmatpush.xpose.msra.mxu0 %v377
        %395 = vmatmul.f32.gmra.mxu0 %v335
        %v396 = vpop.f32.mrf.mxu0
        %v397 = vadd.f32 0.0, %v396
        %398 = vdwg.mxu0
        %399 = vmatpush.xpose.msra.mxu0 0.0
        %400 = vmatpush.xpose.msra.mxu0 0.0
        %401 = vmatpush.xpose.msra.mxu0 0.0
        %402 = vmatpush.xpose.msra.mxu0 0.0
        %403 = vmatpush.xpose.msra.mxu0 0.0
        %404 = vmatpush.xpose.msra.mxu0 0.0
        %405 = vmatpush.xpose.msra.mxu0 0.0
        %406 = vmatpush.xpose.msra.mxu0 0.0
        %407 = vmatpush.xpose.msra.mxu0 0.0
        %408 = vmatpush.xpose.msra.mxu0 0.0
        %409 = vmatpush.xpose.msra.mxu0 0.0
        %410 = vmatpush.xpose.msra.mxu0 0.0
        %411 = vmatpush.xpose.msra.mxu0 0.0
        %412 = vmatpush.xpose.msra.mxu0 0.0
        %413 = vmatpush.xpose.msra.mxu0 0.0
        %414 = vmatpush.xpose.msra.mxu0 %v378
        %415 = vmatmul.f32.gmra.mxu0 %v336
        %v416 = vpop.f32.mrf.mxu0
        %v417 = vadd.f32 %v397, %v416
        %418 = vdwg.mxu0
        %419 = vmatpush.xpose.msra.mxu0 0.0
        %420 = vmatpush.xpose.msra.mxu0 0.0
        %421 = vmatpush.xpose.msra.mxu0 0.0
        %422 = vmatpush.xpose.msra.mxu0 0.0
        %423 = vmatpush.xpose.msra.mxu0 0.0
        %424 = vmatpush.xpose.msra.mxu0 0.0
        %425 = vmatpush.xpose.msra.mxu0 0.0
        %426 = vmatpush.xpose.msra.mxu0 0.0
        %427 = vmatpush.xpose.msra.mxu0 0.0
        %428 = vmatpush.xpose.msra.mxu0 0.0
        %429 = vmatpush.xpose.msra.mxu0 0.0
        %430 = vmatpush.xpose.msra.mxu0 0.0
        %431 = vmatpush.xpose.msra.mxu0 0.0
        %432 = vmatpush.xpose.msra.mxu0 0.0
        %433 = vmatpush.xpose.msra.mxu0 0.0
        %434 = vmatpush.xpose.msra.mxu0 %v368
        %435 = vmatmul.f32.gmra.mxu0 %v329
        %v436 = vpop.f32.mrf.mxu0
        %v437 = vadd.f32 %v417, %v436
        %438 = vdwg.mxu0
        %439 = vmatpush.xpose.msra.mxu0 0.0
        %440 = vmatpush.xpose.msra.mxu0 0.0
        %441 = vmatpush.xpose.msra.mxu0 0.0
        %442 = vmatpush.xpose.msra.mxu0 0.0
        %443 = vmatpush.xpose.msra.mxu0 0.0
        %444 = vmatpush.xpose.msra.mxu0 0.0
        %445 = vmatpush.xpose.msra.mxu0 0.0
        %446 = vmatpush.xpose.msra.mxu0 0.0
        %447 = vmatpush.xpose.msra.mxu0 0.0
        %448 = vmatpush.xpose.msra.mxu0 0.0
        %449 = vmatpush.xpose.msra.mxu0 0.0
        %450 = vmatpush.xpose.msra.mxu0 0.0
        %451 = vmatpush.xpose.msra.mxu0 0.0
        %452 = vmatpush.xpose.msra.mxu0 0.0
        %453 = vmatpush.xpose.msra.mxu0 0.0
        %454 = vmatpush.xpose.msra.mxu0 %v369
        %455 = vmatmul.f32.gmra.mxu0 %v330
        %v456 = vpop.f32.mrf.mxu0
        %v457 = vadd.f32 %v437, %v456
        %458 = vdwg.mxu0
        %v460 = vrot.slane %v457, 7
        %v462 = vsel %vm208, %v297, %v460
        %vm463 = vcmask 25600
        %464 = vst.msk [vmem:[%s175] sm:$0x3] %vm463, %v462
        %s465 = sand.u32 %s92, 1
        %s466 = scalar_lea.sflag [#allocation3], %s465
        %s467 = sand.u32 %s92, 1
        %s468 = smul.addr %s467, 2
        %s469 = scalar_lea.vmem [#allocation2], %s468
        // Predicated region
        $region29: #{tpu_custom_call.1} parent=27 // pred_check
          %p470 = pneg %p102
        $region30: #{tpu_custom_call.1} parent=27 // pred_check_branch
          %472 = sbr.rel (%p470) target = $region32
        $region31: #{tpu_custom_call.1} parent=27 // pred_region
          %474 = vsyncadd %s466, 0
          %s475 = sadd.s32 %s21, %s20
          %s476 = smul.addr %s475, 2
          %s477 = scalar_lea.hbm %s2, %s476
          %s479 = sshll.u32 %s469, 4
          %s480 = int_to_ptr.vmem [resolvable:$true] %s479
          %s481 = sshll.u32 %s477, 4
          %s482 = int_to_ptr.hbm [resolvable:$true] %s481
          %484 = dma.vmem_to_hbm [thread:$0]  %s480, 32, %s482, %s466
        $region32: #{tpu_custom_call.1} parent=27 // pred_fallthru
          _
      $region28: #{tpu_custom_call.1} parent=5 // pred_fallthru
        _
      %p485 = scmp.le.s32.totalorder 2, %s11
      // Predicated region
      $region33: #{tpu_custom_call.1} parent=5 // pred_check
        %p486 = pneg %p485
      $region34: #{tpu_custom_call.1} parent=5 // pred_check_branch
        %488 = sbr.rel (%p486) target = $region36
      $region35: #{tpu_custom_call.1} parent=5 // pred_region
        %s489 = ssub.s32 %s11, 2
        // Predicated region
        $region37: #{tpu_custom_call.1} parent=35 // pred_check
          %p490 = pneg %p108
        $region38: #{tpu_custom_call.1} parent=35 // pred_check_branch
          %492 = sbr.rel (%p490) target = $region40
        $region39: #{tpu_custom_call.1} parent=35 // pred_region
          %s493 = sand.u32 %s93, 1
          %s494 = scalar_lea.sflag [#allocation3], %s493
          %s495 = sand.u32 %s93, 1
          %s496 = smul.addr %s495, 2
          %s497 = scalar_lea.vmem [#allocation2], %s496
          %499 = dma.done %s494, 32
        $region40: #{tpu_custom_call.1} parent=35 // pred_fallthru
          _
      $region36: #{tpu_custom_call.1} parent=5 // pred_fallthru
        _
    $region6: #{tpu_custom_call.1} parent=1 // loop_footer
      %s15 = sadd.s32 1, %s11
    $region7: #{tpu_custom_call.1} parent=1 // loop_footer_branch
      %10 = sbr.rel target = $region3
    $region8: #{tpu_custom_call.1} parent=1 // loop_exit
      _
    %500 = vsyncpa [#allocation3], 1
    %s501 = scalar_lea.sflag [#allocation3], 1
    %502 = vsyncpa %s501, 1

</llo_original>
